<compile_context>
chip_gen: v5e
topology: v5e:2x2
jax: 0.10.0
libtpu: 0.0.40
codegen_flags: <defaults>
</compile_context>

<pallas_src>
import functools

import jax
import jax.numpy as jnp
from jax import lax
from jax.experimental import pallas as pl
from jax.experimental.pallas import tpu as pltpu


def dense_block_kernel(x_ref, s1_ref, b1_ref, w1_ref, b2_ref, w2_ref, o_ref,
                       *, H, W, compute_dtype):
    """One grid step processes `images_per_step` images.

    x_ref  : (C_in,  T)  f32   input slab, T = images_per_step * H*W (lanes)
    s1_ref : (C_in,  1)  f32   folded BN1 scale
    b1_ref : (C_in,  1)  f32   folded BN1 bias
    w1_ref : (C_mid, C_in)     conv1 weight with BN2 scale pre-folded
    b2_ref : (C_mid, 1)  f32   folded BN2 bias
    w2_ref : (G, 9*C_mid)      conv2 weight, contraction k = (ky*3+kx)*C_mid+c
    o_ref  : (G, T)      f32   new features (DenseNet concat done outside)
    """
    _, T = x_ref.shape
    C_mid = w1_ref.shape[0]
    HW = H * W

    # ---- BN1 + ReLU (f32 VPU work, full 128-lane width) ----
    y = jnp.maximum(x_ref[...] * s1_ref[...] + b1_ref[...], 0.0)      # (C_in, T)

    # ---- conv1 (1x1) == channel matmul; BN2 scale already folded into w1 ----
    h = jnp.dot(w1_ref[...], y.astype(compute_dtype),
                preferred_element_type=jnp.float32)                   # (C_mid, T)
    h = jnp.maximum(h + b2_ref[...], 0.0)                             # BN2 bias + ReLU

    # ---- conv2 (3x3, pad=1) as a single im2col matmul ----
    # Local (per-image) pixel index of every lane, for the boundary masks.
    pix = lax.broadcasted_iota(jnp.int32, (C_mid, T), 1)
    if T != HW:
        pix = pix % HW
    col = pix % W

    taps = []
    for oy in (-1, 0, 1):
        for ox in (-1, 0, 1):
            off = oy * W + ox
            # tap[p] = h[p + off] (cyclic roll; wrap-arounds are masked below).
            shifted = h if off == 0 else pltpu.roll(h, (-off) % T, axis=1)
            valid = ((pix + off >= 0) & (pix + off < HW) &
                     (col + ox >= 0) & (col + ox < W))
            taps.append(jnp.where(valid, shifted, 0.0))
    tap_stack = jnp.concatenate(taps, axis=0).astype(compute_dtype)   # (9*C_mid, T)

    out = jnp.dot(w2_ref[...], tap_stack,
                  preferred_element_type=jnp.float32)                 # (G, T)

    # ---- dropout: identity in eval mode ----
    o_ref[...] = out.astype(o_ref.dtype)


def dense_block_forward(x_nchw, params, *, compute_dtype=jnp.bfloat16,
                        images_per_step=1):
    """DenseNet DenseBlock forward (eval mode).

    x_nchw: (N, C_in, H, W) f32 (PyTorch layout).
    Returns (N, C_in + growth_rate, H, W)  ==  torch.cat([x, new], dim=1).
    """
    N, C_in, H, W = x_nchw.shape
    w1_t = params["w1"]                       # torch OIHW: (C_mid, C_in, 1, 1)
    w2_t = params["w2"]                       # torch OIHW: (G, C_mid, 3, 3)
    C_mid = w1_t.shape[0]
    G = w2_t.shape[0]
    HW = H * W
    eps = 1e-5

    # ---- fold BN (eval mode) into per-channel scale/bias (glue JAX) ----
    s1 = params["gamma1"] / jnp.sqrt(params["var1"] + eps)
    b1 = params["beta1"] - params["mean1"] * s1
    s2 = params["gamma2"] / jnp.sqrt(params["var2"] + eps)
    b2 = params["beta2"] - params["mean2"] * s2

    # Fold the BN2 scale into conv1's output channels (exact rewrite).
    w1 = (w1_t.reshape(C_mid, C_in) * s2[:, None]).astype(compute_dtype)
    # conv2 weight -> (G, 9*C_mid); contraction index k = (ky*3 + kx)*C_mid + c.
    w2 = jnp.transpose(w2_t, (0, 2, 3, 1)).reshape(G, 9 * C_mid).astype(compute_dtype)

    s1c = s1.reshape(C_in, 1)
    b1c = b1.reshape(C_in, 1)
    b2c = b2.reshape(C_mid, 1)

    # Channel-major, spatial-in-lanes layout: (C_in, N*H*W).
    x_cm = jnp.transpose(x_nchw, (1, 0, 2, 3)).reshape(C_in, N * HW)

    assert N % images_per_step == 0, "images_per_step must divide the batch"
    T = images_per_step * HW                  # lane width per grid step
    grid = (N // images_per_step,)

    kernel = functools.partial(dense_block_kernel, H=H, W=W,
                               compute_dtype=compute_dtype)

    new_cm = pl.pallas_call(
        kernel,
        out_shape=jax.ShapeDtypeStruct((G, N * HW), jnp.float32),
        grid_spec=pltpu.PrefetchScalarGridSpec(
            num_scalar_prefetch=0,
            grid=grid,
            in_specs=[
                pl.BlockSpec((C_in, T), lambda i: (0, i)),        # x slab
                pl.BlockSpec((C_in, 1), lambda i: (0, 0)),        # s1
                pl.BlockSpec((C_in, 1), lambda i: (0, 0)),        # b1
                pl.BlockSpec((C_mid, C_in), lambda i: (0, 0)),    # w1 (s2-folded)
                pl.BlockSpec((C_mid, 1), lambda i: (0, 0)),       # b2
                pl.BlockSpec((G, 9 * C_mid), lambda i: (0, 0)),   # w2 (im2col)
            ],
            out_specs=pl.BlockSpec((G, T), lambda i: (0, i)),     # lane-dense out
        ),
        compiler_params=pltpu.CompilerParams(
            dimension_semantics=("parallel",),
            vmem_limit_bytes=32 * 1024 * 1024),
    )(x_cm, s1c, b1c, w1, b2c, w2)

    # DenseNet concat along channels (glue JAX; output stays NCHW like torch).
    new_nchw = jnp.transpose(new_cm.reshape(G, N, H, W), (1, 0, 2, 3))
    return jnp.concatenate([x_nchw, new_nchw], axis=1)


def make_params(key, num_input_features, growth_rate, bn_size):
    """Deterministic synthetic parameters with the PyTorch module's shapes."""
    C_in = num_input_features
    C_mid = bn_size * growth_rate
    G = growth_rate
    ks = jax.random.split(key, 10)
    return {
        # BN1 (running stats, eval mode)
        "gamma1": jax.random.uniform(ks[0], (C_in,), minval=0.5, maxval=1.5),
        "beta1": jax.random.normal(ks[1], (C_in,)) * 0.1,
        "mean1": jax.random.normal(ks[2], (C_in,)) * 0.1,
        "var1": jax.random.uniform(ks[3], (C_in,), minval=0.5, maxval=1.5),
        # conv1: torch OIHW (C_mid, C_in, 1, 1)
        "w1": jax.random.normal(ks[4], (C_mid, C_in, 1, 1)) * 0.1,
        # BN2
        "gamma2": jax.random.uniform(ks[5], (C_mid,), minval=0.5, maxval=1.5),
        "beta2": jax.random.normal(ks[6], (C_mid,)) * 0.1,
        "mean2": jax.random.normal(ks[7], (C_mid,)) * 0.1,
        "var2": jax.random.uniform(ks[8], (C_mid,), minval=0.5, maxval=1.5),
        # conv2: torch OIHW (G, C_mid, 3, 3)
        "w2": jax.random.normal(ks[9], (G, C_mid, 3, 3)) * 0.05,
    }


def reference_forward(x_nchw, params):
    """Pure-JAX NCHW reference matching the PyTorch module in eval mode."""
    eps = 1e-5
    s1 = params["gamma1"] / jnp.sqrt(params["var1"] + eps)
    b1 = params["beta1"] - params["mean1"] * s1
    s2 = params["gamma2"] / jnp.sqrt(params["var2"] + eps)
    b2 = params["beta2"] - params["mean2"] * s2
    y = jnp.maximum(x_nchw * s1[None, :, None, None] + b1[None, :, None, None], 0.0)
    h = lax.conv_general_dilated(
        y, params["w1"], window_strides=(1, 1), padding="VALID",
        dimension_numbers=("NCHW", "OIHW", "NCHW"))
    h = jnp.maximum(h * s2[None, :, None, None] + b2[None, :, None, None], 0.0)
    o = lax.conv_general_dilated(
        h, params["w2"], window_strides=(1, 1), padding="SAME",
        dimension_numbers=("NCHW", "OIHW", "NCHW"))
    return jnp.concatenate([x_nchw, o], axis=1)


if __name__ == "__main__":
    # Shapes consistent with the module: N=2, C_in=4, H=W=16,
    # growth_rate=8, bn_size=4  ->  C_mid=32, new features G=8.
    N, C_in, H, W = 2, 4, 16, 16
    growth_rate, bn_size = 8, 4

    key = jax.random.PRNGKey(0)
    kx, kp = jax.random.split(key)
    x = jax.random.normal(kx, (N, C_in, H, W), dtype=jnp.float32)   # PyTorch NCHW
    params = make_params(kp, C_in, growth_rate, bn_size)

    ref = reference_forward(x, params)

    # f32 MXU path, one image per grid step (>=2 parallel steps -> both v7x TCs).
    fwd_f32 = jax.jit(functools.partial(dense_block_forward,
                                        compute_dtype=jnp.float32,
                                        images_per_step=1))
    out_f32 = jax.block_until_ready(fwd_f32(x, params))
    assert out_f32.shape == (N, C_in + growth_rate, H, W), out_f32.shape
    assert jnp.allclose(out_f32, ref, rtol=1e-4, atol=1e-4), "f32 mismatch"

    # Whole-batch-in-one-step variant (amortizes per-step overhead, 1-TC chips).
    fwd_f32_b = jax.jit(functools.partial(dense_block_forward,
                                          compute_dtype=jnp.float32,
                                          images_per_step=N))
    out_f32_b = jax.block_until_ready(fwd_f32_b(x, params))
    assert jnp.allclose(out_f32_b, ref, rtol=1e-4, atol=1e-4), "batched mismatch"

    # bf16 MXU operands, f32 accumulation (2x MXU throughput on v6e/v7x).
    fwd_bf16 = jax.jit(functools.partial(dense_block_forward,
                                         compute_dtype=jnp.bfloat16,
                                         images_per_step=1))
    out_bf16 = jax.block_until_ready(fwd_bf16(x, params))
    assert jnp.allclose(out_bf16, ref, rtol=2e-2, atol=2e-2), "bf16 mismatch"

    print("KERNEL_OK")
</pallas_src>

<mosaic_0001>
module attributes {stable_mosaic.version = 11 : i64} {
  func.func @dense_block_kernel(%arg0: i32, %arg1: memref<4x256xf32, #tpu.memory_space<vmem>>, %arg2: memref<4x1xf32, #tpu.memory_space<vmem>>, %arg3: memref<4x1xf32, #tpu.memory_space<vmem>>, %arg4: memref<32x4xf32, #tpu.memory_space<vmem>>, %arg5: memref<32x1xf32, #tpu.memory_space<vmem>>, %arg6: memref<8x288xf32, #tpu.memory_space<vmem>>, %arg7: memref<8x256xf32, #tpu.memory_space<vmem>>) attributes {dimension_semantics = [#tpu.dimension_semantics<parallel>], iteration_bounds = array<i64: 2>, scalar_prefetch = 0 : i64, scratch_operands = 0 : i64, tpu.core_type = #tpu.core_type<tc>, window_params = [{transform_indices = @transform_0, window_bounds = array<i64: 4, 256>}, {pipeline_mode = #tpu.pipeline_mode<synchronous>, transform_indices = @transform_1, window_bounds = array<i64: 4, 1>}, {pipeline_mode = #tpu.pipeline_mode<synchronous>, transform_indices = @transform_2, window_bounds = array<i64: 4, 1>}, {pipeline_mode = #tpu.pipeline_mode<synchronous>, transform_indices = @transform_3, window_bounds = array<i64: 32, 4>}, {pipeline_mode = #tpu.pipeline_mode<synchronous>, transform_indices = @transform_4, window_bounds = array<i64: 32, 1>}, {pipeline_mode = #tpu.pipeline_mode<synchronous>, transform_indices = @transform_5, window_bounds = array<i64: 8, 288>}, {transform_indices = @transform_6, window_bounds = array<i64: 8, 256>}]} {
    %c0 = arith.constant 0 : index
    %c0_0 = arith.constant 0 : index
    %0 = vector.load %arg1[%c0, %c0_0] : memref<4x256xf32, #tpu.memory_space<vmem>>, vector<4x256xf32>
    %c0_1 = arith.constant 0 : index
    %c0_2 = arith.constant 0 : index
    %1 = vector.load %arg2[%c0_1, %c0_2] : memref<4x1xf32, #tpu.memory_space<vmem>>, vector<4x1xf32>
    %2 = vector.broadcast %1 : vector<4x1xf32> to vector<4x256xf32>
    %3 = arith.mulf %0, %2 : vector<4x256xf32>
    %c0_3 = arith.constant 0 : index
    %c0_4 = arith.constant 0 : index
    %4 = vector.load %arg3[%c0_3, %c0_4] : memref<4x1xf32, #tpu.memory_space<vmem>>, vector<4x1xf32>
    %5 = vector.broadcast %4 : vector<4x1xf32> to vector<4x256xf32>
    %6 = arith.addf %3, %5 : vector<4x256xf32>
    %cst = arith.constant 0.000000e+00 : f32
    %7 = vector.broadcast %cst : f32 to vector<4x256xf32>
    %8 = arith.maximumf %6, %7 : vector<4x256xf32>
    %c0_5 = arith.constant 0 : index
    %c0_6 = arith.constant 0 : index
    %9 = vector.load %arg4[%c0_5, %c0_6] : memref<32x4xf32, #tpu.memory_space<vmem>>, vector<32x4xf32>
    %cst_7 = arith.constant dense<0.000000e+00> : vector<32x256xf32>
    %10 = tpu.matmul %9, %8, %cst_7 {dimension_numbers = #tpu.dot_dimension_numbers<[1], [0], [0], [1], [0, 0, 1, 1], [], []>} : vector<32x4xf32>, vector<4x256xf32>, vector<32x256xf32> -> vector<32x256xf32>
    %c0_8 = arith.constant 0 : index
    %c0_9 = arith.constant 0 : index
    %11 = vector.load %arg5[%c0_8, %c0_9] : memref<32x1xf32, #tpu.memory_space<vmem>>, vector<32x1xf32>
    %12 = vector.broadcast %11 : vector<32x1xf32> to vector<32x256xf32>
    %13 = arith.addf %10, %12 : vector<32x256xf32>
    %cst_10 = arith.constant 0.000000e+00 : f32
    %14 = vector.broadcast %cst_10 : f32 to vector<32x256xf32>
    %15 = arith.maximumf %13, %14 : vector<32x256xf32>
    %16 = tpu.iota {dimensions = array<i32: 1>} : vector<32x256xi32>
    %c16_i32 = arith.constant 16 : i32
    %c0_i32 = arith.constant 0 : i32
    %17 = arith.cmpi eq, %c16_i32, %c0_i32 : i32
    %c1_i32 = arith.constant 1 : i32
    %18 = arith.select %17, %c1_i32, %c16_i32 : i32
    %19 = vector.broadcast %18 : i32 to vector<32x256xi32>
    %20 = arith.remsi %16, %19 : vector<32x256xi32>
    %c0_i32_11 = arith.constant 0 : i32
    %21 = vector.broadcast %c0_i32_11 : i32 to vector<32x256xi32>
    %22 = arith.cmpi ne, %20, %21 : vector<32x256xi32>
    %c0_i32_12 = arith.constant 0 : i32
    %23 = vector.broadcast %c0_i32_12 : i32 to vector<32x256xi32>
    %24 = arith.cmpi slt, %20, %23 : vector<32x256xi32>
    %c0_i32_13 = arith.constant 0 : i32
    %25 = arith.cmpi slt, %18, %c0_i32_13 : i32
    %26 = vector.broadcast %25 : i1 to vector<32x256xi1>
    %27 = vector.broadcast %26 : vector<32x256xi1> to vector<32x256xi1>
    %28 = arith.xori %24, %27 : vector<32x256xi1>
    %29 = arith.andi %28, %22 : vector<32x256xi1>
    %30 = vector.broadcast %18 : i32 to vector<32x256xi32>
    %31 = arith.addi %20, %30 : vector<32x256xi32>
    %32 = arith.select %29, %31, %20 : vector<32x256xi1>, vector<32x256xi32>
    %c17_i32 = arith.constant 17 : i32
    %33 = tpu.dynamic_rotate %15 by %c17_i32 dim 1 : vector<32x256xf32>, i32 -> vector<32x256xf32>
    %c-17_i32 = arith.constant -17 : i32
    %34 = vector.broadcast %c-17_i32 : i32 to vector<32x256xi32>
    %35 = arith.addi %16, %34 : vector<32x256xi32>
    %c0_i32_14 = arith.constant 0 : i32
    %36 = vector.broadcast %c0_i32_14 : i32 to vector<32x256xi32>
    %37 = arith.cmpi sge, %35, %36 : vector<32x256xi32>
    %c-17_i32_15 = arith.constant -17 : i32
    %38 = vector.broadcast %c-17_i32_15 : i32 to vector<32x256xi32>
    %39 = arith.addi %16, %38 : vector<32x256xi32>
    %c256_i32 = arith.constant 256 : i32
    %40 = vector.broadcast %c256_i32 : i32 to vector<32x256xi32>
    %41 = arith.cmpi slt, %39, %40 : vector<32x256xi32>
    %42 = arith.andi %37, %41 : vector<32x256xi1>
    %c-1_i32 = arith.constant -1 : i32
    %43 = vector.broadcast %c-1_i32 : i32 to vector<32x256xi32>
    %44 = arith.addi %32, %43 : vector<32x256xi32>
    %c0_i32_16 = arith.constant 0 : i32
    %45 = vector.broadcast %c0_i32_16 : i32 to vector<32x256xi32>
    %46 = arith.cmpi sge, %44, %45 : vector<32x256xi32>
    %47 = arith.andi %42, %46 : vector<32x256xi1>
    %c-1_i32_17 = arith.constant -1 : i32
    %48 = vector.broadcast %c-1_i32_17 : i32 to vector<32x256xi32>
    %49 = arith.addi %32, %48 : vector<32x256xi32>
    %c16_i32_18 = arith.constant 16 : i32
    %50 = vector.broadcast %c16_i32_18 : i32 to vector<32x256xi32>
    %51 = arith.cmpi slt, %49, %50 : vector<32x256xi32>
    %52 = arith.andi %47, %51 : vector<32x256xi1>
    %cst_19 = arith.constant 0.000000e+00 : f32
    %53 = vector.broadcast %cst_19 : f32 to vector<32x256xf32>
    %54 = arith.select %52, %33, %53 : vector<32x256xi1>, vector<32x256xf32>
    %c16_i32_20 = arith.constant 16 : i32
    %55 = tpu.dynamic_rotate %15 by %c16_i32_20 dim 1 : vector<32x256xf32>, i32 -> vector<32x256xf32>
    %c-16_i32 = arith.constant -16 : i32
    %56 = vector.broadcast %c-16_i32 : i32 to vector<32x256xi32>
    %57 = arith.addi %16, %56 : vector<32x256xi32>
    %c0_i32_21 = arith.constant 0 : i32
    %58 = vector.broadcast %c0_i32_21 : i32 to vector<32x256xi32>
    %59 = arith.cmpi sge, %57, %58 : vector<32x256xi32>
    %c-16_i32_22 = arith.constant -16 : i32
    %60 = vector.broadcast %c-16_i32_22 : i32 to vector<32x256xi32>
    %61 = arith.addi %16, %60 : vector<32x256xi32>
    %c256_i32_23 = arith.constant 256 : i32
    %62 = vector.broadcast %c256_i32_23 : i32 to vector<32x256xi32>
    %63 = arith.cmpi slt, %61, %62 : vector<32x256xi32>
    %64 = arith.andi %59, %63 : vector<32x256xi1>
    %c0_i32_24 = arith.constant 0 : i32
    %65 = vector.broadcast %c0_i32_24 : i32 to vector<32x256xi32>
    %66 = arith.addi %32, %65 : vector<32x256xi32>
    %c0_i32_25 = arith.constant 0 : i32
    %67 = vector.broadcast %c0_i32_25 : i32 to vector<32x256xi32>
    %68 = arith.cmpi sge, %66, %67 : vector<32x256xi32>
    %69 = arith.andi %64, %68 : vector<32x256xi1>
    %c0_i32_26 = arith.constant 0 : i32
    %70 = vector.broadcast %c0_i32_26 : i32 to vector<32x256xi32>
    %71 = arith.addi %32, %70 : vector<32x256xi32>
    %c16_i32_27 = arith.constant 16 : i32
    %72 = vector.broadcast %c16_i32_27 : i32 to vector<32x256xi32>
    %73 = arith.cmpi slt, %71, %72 : vector<32x256xi32>
    %74 = arith.andi %69, %73 : vector<32x256xi1>
    %cst_28 = arith.constant 0.000000e+00 : f32
    %75 = vector.broadcast %cst_28 : f32 to vector<32x256xf32>
    %76 = arith.select %74, %55, %75 : vector<32x256xi1>, vector<32x256xf32>
    %c15_i32 = arith.constant 15 : i32
    %77 = tpu.dynamic_rotate %15 by %c15_i32 dim 1 : vector<32x256xf32>, i32 -> vector<32x256xf32>
    %c-15_i32 = arith.constant -15 : i32
    %78 = vector.broadcast %c-15_i32 : i32 to vector<32x256xi32>
    %79 = arith.addi %16, %78 : vector<32x256xi32>
    %c0_i32_29 = arith.constant 0 : i32
    %80 = vector.broadcast %c0_i32_29 : i32 to vector<32x256xi32>
    %81 = arith.cmpi sge, %79, %80 : vector<32x256xi32>
    %c-15_i32_30 = arith.constant -15 : i32
    %82 = vector.broadcast %c-15_i32_30 : i32 to vector<32x256xi32>
    %83 = arith.addi %16, %82 : vector<32x256xi32>
    %c256_i32_31 = arith.constant 256 : i32
    %84 = vector.broadcast %c256_i32_31 : i32 to vector<32x256xi32>
    %85 = arith.cmpi slt, %83, %84 : vector<32x256xi32>
    %86 = arith.andi %81, %85 : vector<32x256xi1>
    %c1_i32_32 = arith.constant 1 : i32
    %87 = vector.broadcast %c1_i32_32 : i32 to vector<32x256xi32>
    %88 = arith.addi %32, %87 : vector<32x256xi32>
    %c0_i32_33 = arith.constant 0 : i32
    %89 = vector.broadcast %c0_i32_33 : i32 to vector<32x256xi32>
    %90 = arith.cmpi sge, %88, %89 : vector<32x256xi32>
    %91 = arith.andi %86, %90 : vector<32x256xi1>
    %c1_i32_34 = arith.constant 1 : i32
    %92 = vector.broadcast %c1_i32_34 : i32 to vector<32x256xi32>
    %93 = arith.addi %32, %92 : vector<32x256xi32>
    %c16_i32_35 = arith.constant 16 : i32
    %94 = vector.broadcast %c16_i32_35 : i32 to vector<32x256xi32>
    %95 = arith.cmpi slt, %93, %94 : vector<32x256xi32>
    %96 = arith.andi %91, %95 : vector<32x256xi1>
    %cst_36 = arith.constant 0.000000e+00 : f32
    %97 = vector.broadcast %cst_36 : f32 to vector<32x256xf32>
    %98 = arith.select %96, %77, %97 : vector<32x256xi1>, vector<32x256xf32>
    %c1_i32_37 = arith.constant 1 : i32
    %99 = tpu.dynamic_rotate %15 by %c1_i32_37 dim 1 : vector<32x256xf32>, i32 -> vector<32x256xf32>
    %c-1_i32_38 = arith.constant -1 : i32
    %100 = vector.broadcast %c-1_i32_38 : i32 to vector<32x256xi32>
    %101 = arith.addi %16, %100 : vector<32x256xi32>
    %c0_i32_39 = arith.constant 0 : i32
    %102 = vector.broadcast %c0_i32_39 : i32 to vector<32x256xi32>
    %103 = arith.cmpi sge, %101, %102 : vector<32x256xi32>
    %c-1_i32_40 = arith.constant -1 : i32
    %104 = vector.broadcast %c-1_i32_40 : i32 to vector<32x256xi32>
    %105 = arith.addi %16, %104 : vector<32x256xi32>
    %c256_i32_41 = arith.constant 256 : i32
    %106 = vector.broadcast %c256_i32_41 : i32 to vector<32x256xi32>
    %107 = arith.cmpi slt, %105, %106 : vector<32x256xi32>
    %108 = arith.andi %103, %107 : vector<32x256xi1>
    %c-1_i32_42 = arith.constant -1 : i32
    %109 = vector.broadcast %c-1_i32_42 : i32 to vector<32x256xi32>
    %110 = arith.addi %32, %109 : vector<32x256xi32>
    %c0_i32_43 = arith.constant 0 : i32
    %111 = vector.broadcast %c0_i32_43 : i32 to vector<32x256xi32>
    %112 = arith.cmpi sge, %110, %111 : vector<32x256xi32>
    %113 = arith.andi %108, %112 : vector<32x256xi1>
    %c-1_i32_44 = arith.constant -1 : i32
    %114 = vector.broadcast %c-1_i32_44 : i32 to vector<32x256xi32>
    %115 = arith.addi %32, %114 : vector<32x256xi32>
    %c16_i32_45 = arith.constant 16 : i32
    %116 = vector.broadcast %c16_i32_45 : i32 to vector<32x256xi32>
    %117 = arith.cmpi slt, %115, %116 : vector<32x256xi32>
    %118 = arith.andi %113, %117 : vector<32x256xi1>
    %cst_46 = arith.constant 0.000000e+00 : f32
    %119 = vector.broadcast %cst_46 : f32 to vector<32x256xf32>
    %120 = arith.select %118, %99, %119 : vector<32x256xi1>, vector<32x256xf32>
    %c0_i32_47 = arith.constant 0 : i32
    %121 = vector.broadcast %c0_i32_47 : i32 to vector<32x256xi32>
    %122 = arith.addi %16, %121 : vector<32x256xi32>
    %c0_i32_48 = arith.constant 0 : i32
    %123 = vector.broadcast %c0_i32_48 : i32 to vector<32x256xi32>
    %124 = arith.cmpi sge, %122, %123 : vector<32x256xi32>
    %c0_i32_49 = arith.constant 0 : i32
    %125 = vector.broadcast %c0_i32_49 : i32 to vector<32x256xi32>
    %126 = arith.addi %16, %125 : vector<32x256xi32>
    %c256_i32_50 = arith.constant 256 : i32
    %127 = vector.broadcast %c256_i32_50 : i32 to vector<32x256xi32>
    %128 = arith.cmpi slt, %126, %127 : vector<32x256xi32>
    %129 = arith.andi %124, %128 : vector<32x256xi1>
    %c0_i32_51 = arith.constant 0 : i32
    %130 = vector.broadcast %c0_i32_51 : i32 to vector<32x256xi32>
    %131 = arith.addi %32, %130 : vector<32x256xi32>
    %c0_i32_52 = arith.constant 0 : i32
    %132 = vector.broadcast %c0_i32_52 : i32 to vector<32x256xi32>
    %133 = arith.cmpi sge, %131, %132 : vector<32x256xi32>
    %134 = arith.andi %129, %133 : vector<32x256xi1>
    %c0_i32_53 = arith.constant 0 : i32
    %135 = vector.broadcast %c0_i32_53 : i32 to vector<32x256xi32>
    %136 = arith.addi %32, %135 : vector<32x256xi32>
    %c16_i32_54 = arith.constant 16 : i32
    %137 = vector.broadcast %c16_i32_54 : i32 to vector<32x256xi32>
    %138 = arith.cmpi slt, %136, %137 : vector<32x256xi32>
    %139 = arith.andi %134, %138 : vector<32x256xi1>
    %cst_55 = arith.constant 0.000000e+00 : f32
    %140 = vector.broadcast %cst_55 : f32 to vector<32x256xf32>
    %141 = arith.select %139, %15, %140 : vector<32x256xi1>, vector<32x256xf32>
    %c255_i32 = arith.constant 255 : i32
    %142 = tpu.dynamic_rotate %15 by %c255_i32 dim 1 : vector<32x256xf32>, i32 -> vector<32x256xf32>
    %c1_i32_56 = arith.constant 1 : i32
    %143 = vector.broadcast %c1_i32_56 : i32 to vector<32x256xi32>
    %144 = arith.addi %16, %143 : vector<32x256xi32>
    %c0_i32_57 = arith.constant 0 : i32
    %145 = vector.broadcast %c0_i32_57 : i32 to vector<32x256xi32>
    %146 = arith.cmpi sge, %144, %145 : vector<32x256xi32>
    %c1_i32_58 = arith.constant 1 : i32
    %147 = vector.broadcast %c1_i32_58 : i32 to vector<32x256xi32>
    %148 = arith.addi %16, %147 : vector<32x256xi32>
    %c256_i32_59 = arith.constant 256 : i32
    %149 = vector.broadcast %c256_i32_59 : i32 to vector<32x256xi32>
    %150 = arith.cmpi slt, %148, %149 : vector<32x256xi32>
    %151 = arith.andi %146, %150 : vector<32x256xi1>
    %c1_i32_60 = arith.constant 1 : i32
    %152 = vector.broadcast %c1_i32_60 : i32 to vector<32x256xi32>
    %153 = arith.addi %32, %152 : vector<32x256xi32>
    %c0_i32_61 = arith.constant 0 : i32
    %154 = vector.broadcast %c0_i32_61 : i32 to vector<32x256xi32>
    %155 = arith.cmpi sge, %153, %154 : vector<32x256xi32>
    %156 = arith.andi %151, %155 : vector<32x256xi1>
    %c1_i32_62 = arith.constant 1 : i32
    %157 = vector.broadcast %c1_i32_62 : i32 to vector<32x256xi32>
    %158 = arith.addi %32, %157 : vector<32x256xi32>
    %c16_i32_63 = arith.constant 16 : i32
    %159 = vector.broadcast %c16_i32_63 : i32 to vector<32x256xi32>
    %160 = arith.cmpi slt, %158, %159 : vector<32x256xi32>
    %161 = arith.andi %156, %160 : vector<32x256xi1>
    %cst_64 = arith.constant 0.000000e+00 : f32
    %162 = vector.broadcast %cst_64 : f32 to vector<32x256xf32>
    %163 = arith.select %161, %142, %162 : vector<32x256xi1>, vector<32x256xf32>
    %c241_i32 = arith.constant 241 : i32
    %164 = tpu.dynamic_rotate %15 by %c241_i32 dim 1 : vector<32x256xf32>, i32 -> vector<32x256xf32>
    %c15_i32_65 = arith.constant 15 : i32
    %165 = vector.broadcast %c15_i32_65 : i32 to vector<32x256xi32>
    %166 = arith.addi %16, %165 : vector<32x256xi32>
    %c0_i32_66 = arith.constant 0 : i32
    %167 = vector.broadcast %c0_i32_66 : i32 to vector<32x256xi32>
    %168 = arith.cmpi sge, %166, %167 : vector<32x256xi32>
    %c15_i32_67 = arith.constant 15 : i32
    %169 = vector.broadcast %c15_i32_67 : i32 to vector<32x256xi32>
    %170 = arith.addi %16, %169 : vector<32x256xi32>
    %c256_i32_68 = arith.constant 256 : i32
    %171 = vector.broadcast %c256_i32_68 : i32 to vector<32x256xi32>
    %172 = arith.cmpi slt, %170, %171 : vector<32x256xi32>
    %173 = arith.andi %168, %172 : vector<32x256xi1>
    %c-1_i32_69 = arith.constant -1 : i32
    %174 = vector.broadcast %c-1_i32_69 : i32 to vector<32x256xi32>
    %175 = arith.addi %32, %174 : vector<32x256xi32>
    %c0_i32_70 = arith.constant 0 : i32
    %176 = vector.broadcast %c0_i32_70 : i32 to vector<32x256xi32>
    %177 = arith.cmpi sge, %175, %176 : vector<32x256xi32>
    %178 = arith.andi %173, %177 : vector<32x256xi1>
    %c-1_i32_71 = arith.constant -1 : i32
    %179 = vector.broadcast %c-1_i32_71 : i32 to vector<32x256xi32>
    %180 = arith.addi %32, %179 : vector<32x256xi32>
    %c16_i32_72 = arith.constant 16 : i32
    %181 = vector.broadcast %c16_i32_72 : i32 to vector<32x256xi32>
    %182 = arith.cmpi slt, %180, %181 : vector<32x256xi32>
    %183 = arith.andi %178, %182 : vector<32x256xi1>
    %cst_73 = arith.constant 0.000000e+00 : f32
    %184 = vector.broadcast %cst_73 : f32 to vector<32x256xf32>
    %185 = arith.select %183, %164, %184 : vector<32x256xi1>, vector<32x256xf32>
    %c240_i32 = arith.constant 240 : i32
    %186 = tpu.dynamic_rotate %15 by %c240_i32 dim 1 : vector<32x256xf32>, i32 -> vector<32x256xf32>
    %c16_i32_74 = arith.constant 16 : i32
    %187 = vector.broadcast %c16_i32_74 : i32 to vector<32x256xi32>
    %188 = arith.addi %16, %187 : vector<32x256xi32>
    %c0_i32_75 = arith.constant 0 : i32
    %189 = vector.broadcast %c0_i32_75 : i32 to vector<32x256xi32>
    %190 = arith.cmpi sge, %188, %189 : vector<32x256xi32>
    %c16_i32_76 = arith.constant 16 : i32
    %191 = vector.broadcast %c16_i32_76 : i32 to vector<32x256xi32>
    %192 = arith.addi %16, %191 : vector<32x256xi32>
    %c256_i32_77 = arith.constant 256 : i32
    %193 = vector.broadcast %c256_i32_77 : i32 to vector<32x256xi32>
    %194 = arith.cmpi slt, %192, %193 : vector<32x256xi32>
    %195 = arith.andi %190, %194 : vector<32x256xi1>
    %c0_i32_78 = arith.constant 0 : i32
    %196 = vector.broadcast %c0_i32_78 : i32 to vector<32x256xi32>
    %197 = arith.addi %32, %196 : vector<32x256xi32>
    %c0_i32_79 = arith.constant 0 : i32
    %198 = vector.broadcast %c0_i32_79 : i32 to vector<32x256xi32>
    %199 = arith.cmpi sge, %197, %198 : vector<32x256xi32>
    %200 = arith.andi %195, %199 : vector<32x256xi1>
    %c0_i32_80 = arith.constant 0 : i32
    %201 = vector.broadcast %c0_i32_80 : i32 to vector<32x256xi32>
    %202 = arith.addi %32, %201 : vector<32x256xi32>
    %c16_i32_81 = arith.constant 16 : i32
    %203 = vector.broadcast %c16_i32_81 : i32 to vector<32x256xi32>
    %204 = arith.cmpi slt, %202, %203 : vector<32x256xi32>
    %205 = arith.andi %200, %204 : vector<32x256xi1>
    %cst_82 = arith.constant 0.000000e+00 : f32
    %206 = vector.broadcast %cst_82 : f32 to vector<32x256xf32>
    %207 = arith.select %205, %186, %206 : vector<32x256xi1>, vector<32x256xf32>
    %c239_i32 = arith.constant 239 : i32
    %208 = tpu.dynamic_rotate %15 by %c239_i32 dim 1 : vector<32x256xf32>, i32 -> vector<32x256xf32>
    %c17_i32_83 = arith.constant 17 : i32
    %209 = vector.broadcast %c17_i32_83 : i32 to vector<32x256xi32>
    %210 = arith.addi %16, %209 : vector<32x256xi32>
    %c0_i32_84 = arith.constant 0 : i32
    %211 = vector.broadcast %c0_i32_84 : i32 to vector<32x256xi32>
    %212 = arith.cmpi sge, %210, %211 : vector<32x256xi32>
    %c17_i32_85 = arith.constant 17 : i32
    %213 = vector.broadcast %c17_i32_85 : i32 to vector<32x256xi32>
    %214 = arith.addi %16, %213 : vector<32x256xi32>
    %c256_i32_86 = arith.constant 256 : i32
    %215 = vector.broadcast %c256_i32_86 : i32 to vector<32x256xi32>
    %216 = arith.cmpi slt, %214, %215 : vector<32x256xi32>
    %217 = arith.andi %212, %216 : vector<32x256xi1>
    %c1_i32_87 = arith.constant 1 : i32
    %218 = vector.broadcast %c1_i32_87 : i32 to vector<32x256xi32>
    %219 = arith.addi %32, %218 : vector<32x256xi32>
    %c0_i32_88 = arith.constant 0 : i32
    %220 = vector.broadcast %c0_i32_88 : i32 to vector<32x256xi32>
    %221 = arith.cmpi sge, %219, %220 : vector<32x256xi32>
    %222 = arith.andi %217, %221 : vector<32x256xi1>
    %c1_i32_89 = arith.constant 1 : i32
    %223 = vector.broadcast %c1_i32_89 : i32 to vector<32x256xi32>
    %224 = arith.addi %32, %223 : vector<32x256xi32>
    %c16_i32_90 = arith.constant 16 : i32
    %225 = vector.broadcast %c16_i32_90 : i32 to vector<32x256xi32>
    %226 = arith.cmpi slt, %224, %225 : vector<32x256xi32>
    %227 = arith.andi %222, %226 : vector<32x256xi1>
    %cst_91 = arith.constant 0.000000e+00 : f32
    %228 = vector.broadcast %cst_91 : f32 to vector<32x256xf32>
    %229 = arith.select %227, %208, %228 : vector<32x256xi1>, vector<32x256xf32>
    %230 = tpu.concatenate %54, %76, %98, %120, %141, %163, %185, %207, %229 in 0 : vector<32x256xf32>, vector<32x256xf32>, vector<32x256xf32>, vector<32x256xf32>, vector<32x256xf32>, vector<32x256xf32>, vector<32x256xf32>, vector<32x256xf32>, vector<32x256xf32> -> vector<288x256xf32>
    %c0_92 = arith.constant 0 : index
    %c0_93 = arith.constant 0 : index
    %231 = vector.load %arg6[%c0_92, %c0_93] : memref<8x288xf32, #tpu.memory_space<vmem>>, vector<8x288xf32>
    %cst_94 = arith.constant dense<0.000000e+00> : vector<8x256xf32>
    %232 = tpu.matmul %231, %230, %cst_94 {dimension_numbers = #tpu.dot_dimension_numbers<[1], [0], [0], [1], [0, 0, 1, 1], [], []>} : vector<8x288xf32>, vector<288x256xf32>, vector<8x256xf32> -> vector<8x256xf32>
    %c0_95 = arith.constant 0 : index
    %c0_96 = arith.constant 0 : index
    %233 = vector.load %arg7[%c0_95, %c0_96] : memref<8x256xf32, #tpu.memory_space<vmem>>, vector<8x256xf32>
    tpu.vector_store %arg7[%c0_95, %c0_96], %232 {strides = array<i32>} : memref<8x256xf32, #tpu.memory_space<vmem>>, vector<8x256xf32>,
    return
  }
  func.func @transform_0(%arg0: i32) -> (i32, i32) {
    %c0_i32 = arith.constant 0 : i32
    %c0_i32_0 = arith.constant 0 : i32
    return %c0_i32, %arg0 : i32, i32
  }
  func.func @transform_1(%arg0: i32) -> (i32, i32) {
    %c0_i32 = arith.constant 0 : i32
    %c0_i32_0 = arith.constant 0 : i32
    %c0_i32_1 = arith.constant 0 : i32
    return %c0_i32, %c0_i32_0 : i32, i32
  }
  func.func @transform_2(%arg0: i32) -> (i32, i32) {
    %c0_i32 = arith.constant 0 : i32
    %c0_i32_0 = arith.constant 0 : i32
    %c0_i32_1 = arith.constant 0 : i32
    return %c0_i32, %c0_i32_0 : i32, i32
  }
  func.func @transform_3(%arg0: i32) -> (i32, i32) {
    %c0_i32 = arith.constant 0 : i32
    %c0_i32_0 = arith.constant 0 : i32
    %c0_i32_1 = arith.constant 0 : i32
    return %c0_i32, %c0_i32_0 : i32, i32
  }
  func.func @transform_4(%arg0: i32) -> (i32, i32) {
    %c0_i32 = arith.constant 0 : i32
    %c0_i32_0 = arith.constant 0 : i32
    %c0_i32_1 = arith.constant 0 : i32
    return %c0_i32, %c0_i32_0 : i32, i32
  }
  func.func @transform_5(%arg0: i32) -> (i32, i32) {
    %c0_i32 = arith.constant 0 : i32
    %c0_i32_0 = arith.constant 0 : i32
    %c0_i32_1 = arith.constant 0 : i32
    return %c0_i32, %c0_i32_0 : i32, i32
  }
  func.func @transform_6(%arg0: i32) -> (i32, i32) {
    %c0_i32 = arith.constant 0 : i32
    %c0_i32_0 = arith.constant 0 : i32
    return %c0_i32, %arg0 : i32, i32
  }
}

</mosaic_0001>

<llo_original>
// kernel: dense_block_forward.1
$region0: #{dense_block_forward.1}
  #allocation0 [shape = 'u32[]', space=smem, size = 0x4, offset = 0x4, fixed_abs, tag = 'smem constant byte address 0x4 - core index']
  #allocation1 [shape = 'u32[72,128]{1,0:T(1,128)}', space=vmem, size = 0x9000, scoped, tag = 'internal scratch']
  %s0 = inlined_call_operand.vmem [shape: f32[4,512], index: 0, kind: input, shape index: {}]
  %s1 = inlined_call_operand.vmem [shape: f32[4,1], index: 1, kind: input, shape index: {}]
  %s2 = inlined_call_operand.vmem [shape: f32[4,1], index: 2, kind: input, shape index: {}]
  %s3 = inlined_call_operand.vmem [shape: f32[32,4], index: 3, kind: input, shape index: {}]
  %s4 = inlined_call_operand.vmem [shape: f32[32,1], index: 4, kind: input, shape index: {}]
  %s5 = inlined_call_operand.vmem [shape: f32[8,288], index: 5, kind: input, shape index: {}]
  %s6 = inlined_call_operand.vmem [shape: f32[8,512], index: 6, kind: output, shape index: {}]
  %s7 = sld [smem:[#allocation0]]
  $region57: #{dense_block_forward.1} parent=0
    _
  %s9 = ssub.s32 1, %s7
  %s10 = scalar_select 0, %s9, %s7
  loop: start=0, step=1, limit=4
  $region2: #{dense_block_forward.1} parent=0 // loop_pre_header
    _
  $region3: #{dense_block_forward.1} parent=0 // loop_header
    %s12 = sphi 0, %s16
    %p13 = scmp.ge.s32.totalorder %s12, 4
    %s22 = sphi 0, %s24
    %s25 = sphi 0, %s22
    %s26 = sphi 0, %s25
    %s42 = sphi 0, %s26
    %s46 = sphi 0, %s46
    %s48 = sphi 0, %s46
    %s49 = sphi 0, %s48
    %s63 = sphi 0, %s49
    %s67 = sphi 0, %s67
    %s69 = sphi 0, %s67
    %s70 = sphi 0, %s69
    %s84 = sphi 0, %s70
    %s88 = sphi 0, %s88
    %s90 = sphi 0, %s88
    %s91 = sphi 0, %s90
    %s105 = sphi 0, %s91
    %s109 = sphi 0, %s109
    %s111 = sphi 0, %s109
    %s112 = sphi 0, %s111
    %s126 = sphi 0, %s112
    %s130 = sphi 0, %s130
    %s132 = sphi 0, %s130
    %s133 = sphi 0, %s132
    %s147 = sphi 0, %s133
    %s153 = sphi 0, %s155
    %s156 = sphi 0, %s153
    %s157 = sphi 0, %s156
    %s173 = sphi 0, %s157
  $region4: #{dense_block_forward.1} parent=0 // loop_header_branch
    %15 = sbr.rel (%p13) target = $region8
  $region5: #{dense_block_forward.1} parent=0 // loop_body
    %s17 = ssub.s32 %s12, 1
    %s18 = ssub.s32 %s12, 2
    %s19 = sadd.s32 %s12, 1
    %s20 = ssub.s32 %s12, %s19
    %p21 = scmp.eq.s32.totalorder %s20, 0
    %s23 = sadd.s32 %s22, 1
    %s24 = scalar_select %p21, %s22, %s23
    %p27 = pneg %p21
    %p28 = scmp.eq.s32.totalorder %s12, 1
    %p29 = por %p27, %p28
    %p30 = scmp.ne.s32.totalorder %s22, %s25
    %p31 = scmp.eq.s32.totalorder %s12, 0
    %p32 = por %p30, %p31
    %p33 = scmp.ne.s32.totalorder %s22, %s25
    %p34 = scmp.eq.s32.totalorder %s17, 1
    %p35 = por %p33, %p34
    %p36 = scmp.ne.s32.totalorder %s25, %s26
    %p37 = scmp.eq.s32.totalorder %s17, 0
    %p38 = por %p36, %p37
    %p39 = scmp.ne.s32.totalorder %s25, %s26
    %p40 = scmp.eq.s32.totalorder %s18, 1
    %p41 = por %p39, %p40
    %p43 = scmp.ne.s32.totalorder %s26, %s42
    %p44 = scmp.eq.s32.totalorder %s18, 0
    %p45 = por %p43, %p44
    %s47 = sadd.s32 %s46, 1
    %p50 = scmp.eq.s32.totalorder %s12, 1
    %p51 = scmp.ne.s32.totalorder %s46, %s48
    %p52 = scmp.eq.s32.totalorder %s12, 0
    %p53 = por %p51, %p52
    %p54 = scmp.ne.s32.totalorder %s46, %s48
    %p55 = scmp.eq.s32.totalorder %s17, 1
    %p56 = por %p54, %p55
    %p57 = scmp.ne.s32.totalorder %s48, %s49
    %p58 = scmp.eq.s32.totalorder %s17, 0
    %p59 = por %p57, %p58
    %p60 = scmp.ne.s32.totalorder %s48, %s49
    %p61 = scmp.eq.s32.totalorder %s18, 1
    %p62 = por %p60, %p61
    %p64 = scmp.ne.s32.totalorder %s49, %s63
    %p65 = scmp.eq.s32.totalorder %s18, 0
    %p66 = por %p64, %p65
    %s68 = sadd.s32 %s67, 1
    %p71 = scmp.eq.s32.totalorder %s12, 1
    %p72 = scmp.ne.s32.totalorder %s67, %s69
    %p73 = scmp.eq.s32.totalorder %s12, 0
    %p74 = por %p72, %p73
    %p75 = scmp.ne.s32.totalorder %s67, %s69
    %p76 = scmp.eq.s32.totalorder %s17, 1
    %p77 = por %p75, %p76
    %p78 = scmp.ne.s32.totalorder %s69, %s70
    %p79 = scmp.eq.s32.totalorder %s17, 0
    %p80 = por %p78, %p79
    %p81 = scmp.ne.s32.totalorder %s69, %s70
    %p82 = scmp.eq.s32.totalorder %s18, 1
    %p83 = por %p81, %p82
    %p85 = scmp.ne.s32.totalorder %s70, %s84
    %p86 = scmp.eq.s32.totalorder %s18, 0
    %p87 = por %p85, %p86
    %s89 = sadd.s32 %s88, 1
    %p92 = scmp.eq.s32.totalorder %s12, 1
    %p93 = scmp.ne.s32.totalorder %s88, %s90
    %p94 = scmp.eq.s32.totalorder %s12, 0
    %p95 = por %p93, %p94
    %p96 = scmp.ne.s32.totalorder %s88, %s90
    %p97 = scmp.eq.s32.totalorder %s17, 1
    %p98 = por %p96, %p97
    %p99 = scmp.ne.s32.totalorder %s90, %s91
    %p100 = scmp.eq.s32.totalorder %s17, 0
    %p101 = por %p99, %p100
    %p102 = scmp.ne.s32.totalorder %s90, %s91
    %p103 = scmp.eq.s32.totalorder %s18, 1
    %p104 = por %p102, %p103
    %p106 = scmp.ne.s32.totalorder %s91, %s105
    %p107 = scmp.eq.s32.totalorder %s18, 0
    %p108 = por %p106, %p107
    %s110 = sadd.s32 %s109, 1
    %p113 = scmp.eq.s32.totalorder %s12, 1
    %p114 = scmp.ne.s32.totalorder %s109, %s111
    %p115 = scmp.eq.s32.totalorder %s12, 0
    %p116 = por %p114, %p115
    %p117 = scmp.ne.s32.totalorder %s109, %s111
    %p118 = scmp.eq.s32.totalorder %s17, 1
    %p119 = por %p117, %p118
    %p120 = scmp.ne.s32.totalorder %s111, %s112
    %p121 = scmp.eq.s32.totalorder %s17, 0
    %p122 = por %p120, %p121
    %p123 = scmp.ne.s32.totalorder %s111, %s112
    %p124 = scmp.eq.s32.totalorder %s18, 1
    %p125 = por %p123, %p124
    %p127 = scmp.ne.s32.totalorder %s112, %s126
    %p128 = scmp.eq.s32.totalorder %s18, 0
    %p129 = por %p127, %p128
    %s131 = sadd.s32 %s130, 1
    %p134 = scmp.eq.s32.totalorder %s12, 1
    %p135 = scmp.ne.s32.totalorder %s130, %s132
    %p136 = scmp.eq.s32.totalorder %s12, 0
    %p137 = por %p135, %p136
    %p138 = scmp.ne.s32.totalorder %s130, %s132
    %p139 = scmp.eq.s32.totalorder %s17, 1
    %p140 = por %p138, %p139
    %p141 = scmp.ne.s32.totalorder %s132, %s133
    %p142 = scmp.eq.s32.totalorder %s17, 0
    %p143 = por %p141, %p142
    %p144 = scmp.ne.s32.totalorder %s132, %s133
    %p145 = scmp.eq.s32.totalorder %s18, 1
    %p146 = por %p144, %p145
    %p148 = scmp.ne.s32.totalorder %s133, %s147
    %p149 = scmp.eq.s32.totalorder %s18, 0
    %p150 = por %p148, %p149
    %s151 = ssub.s32 %s12, %s19
    %p152 = scmp.eq.s32.totalorder %s151, 0
    %s154 = sadd.s32 %s153, 1
    %s155 = scalar_select %p152, %s153, %s154
    %p158 = pneg %p152
    %p159 = scmp.eq.s32.totalorder %s12, 1
    %p160 = por %p158, %p159
    %p161 = scmp.ne.s32.totalorder %s153, %s156
    %p162 = scmp.eq.s32.totalorder %s12, 0
    %p163 = por %p161, %p162
    %p164 = scmp.ne.s32.totalorder %s153, %s156
    %p165 = scmp.eq.s32.totalorder %s17, 1
    %p166 = por %p164, %p165
    %p167 = scmp.ne.s32.totalorder %s156, %s157
    %p168 = scmp.eq.s32.totalorder %s17, 0
    %p169 = por %p167, %p168
    %p170 = scmp.ne.s32.totalorder %s156, %s157
    %p171 = scmp.eq.s32.totalorder %s18, 1
    %p172 = por %p170, %p171
    %p174 = scmp.ne.s32.totalorder %s157, %s173
    %p175 = scmp.eq.s32.totalorder %s18, 0
    %p176 = por %p174, %p175
    %p177 = scmp.le.s32.totalorder 1, %s12
    %p178 = scmp.lt.s32.totalorder %s12, 3
    %p179 = pnand %p177, %p178
    %p180 = pneg %p179
    // Predicated region
    $region9: #{dense_block_forward.1} parent=5 // pred_check
      _
    $region10: #{dense_block_forward.1} parent=5 // pred_check_branch
      %182 = sbr.rel (%p179) target = $region12
    $region11: #{dense_block_forward.1} parent=5 // pred_region
      %s183 = ssub.s32 %s12, 1
      // Predicated region
      $region13: #{dense_block_forward.1} parent=11 // pred_check
        %p184 = pneg %p59
      $region14: #{dense_block_forward.1} parent=11 // pred_check_branch
        %186 = sbr.rel (%p184) target = $region16
      $region15: #{dense_block_forward.1} parent=11 // pred_region
        _
      $region16: #{dense_block_forward.1} parent=11 // pred_fallthru
        _
      // Predicated region
      $region17: #{dense_block_forward.1} parent=11 // pred_check
        %p187 = pneg %p80
      $region18: #{dense_block_forward.1} parent=11 // pred_check_branch
        %189 = sbr.rel (%p187) target = $region20
      $region19: #{dense_block_forward.1} parent=11 // pred_region
        _
      $region20: #{dense_block_forward.1} parent=11 // pred_fallthru
        _
      // Predicated region
      $region21: #{dense_block_forward.1} parent=11 // pred_check
        %p190 = pneg %p101
      $region22: #{dense_block_forward.1} parent=11 // pred_check_branch
        %192 = sbr.rel (%p190) target = $region24
      $region23: #{dense_block_forward.1} parent=11 // pred_region
        _
      $region24: #{dense_block_forward.1} parent=11 // pred_fallthru
        _
      // Predicated region
      $region25: #{dense_block_forward.1} parent=11 // pred_check
        %p193 = pneg %p122
      $region26: #{dense_block_forward.1} parent=11 // pred_check_branch
        %195 = sbr.rel (%p193) target = $region28
      $region27: #{dense_block_forward.1} parent=11 // pred_region
        _
      $region28: #{dense_block_forward.1} parent=11 // pred_fallthru
        _
      // Predicated region
      $region29: #{dense_block_forward.1} parent=11 // pred_check
        %p196 = pneg %p143
      $region30: #{dense_block_forward.1} parent=11 // pred_check_branch
        %198 = sbr.rel (%p196) target = $region32
      $region31: #{dense_block_forward.1} parent=11 // pred_region
        _
      $region32: #{dense_block_forward.1} parent=11 // pred_fallthru
        _
    $region12: #{dense_block_forward.1} parent=5 // pred_fallthru
      _
    %p199 = scmp.lt.s32.totalorder %s12, 2
    // Predicated region
    $region33: #{dense_block_forward.1} parent=5 // pred_check
      %p200 = pneg %p199
    $region34: #{dense_block_forward.1} parent=5 // pred_check_branch
      %202 = sbr.rel (%p200) target = $region36
    $region35: #{dense_block_forward.1} parent=5 // pred_region
      // Predicated region
      $region37: #{dense_block_forward.1} parent=35 // pred_check
        %p203 = pneg %p32
      $region38: #{dense_block_forward.1} parent=35 // pred_check_branch
        %205 = sbr.rel (%p203) target = $region40
      $region39: #{dense_block_forward.1} parent=35 // pred_region
        %s206 = smul.u32 2, %s12
        %p207 = scmp.lt.s32.totalorder %s206, 3
        %s208 = scalar_select %p207, %s206, 3
        %s209 = smul.addr %s208, 4
        %s210 = scalar_lea.vmem %s0, %s209
        %s211 = smul.u32 2, %s12
      $region40: #{dense_block_forward.1} parent=35 // pred_fallthru
        _
    $region36: #{dense_block_forward.1} parent=5 // pred_fallthru
      _
    %p212 = scmp.le.s32.totalorder 1, %s12
    %p213 = scmp.lt.s32.totalorder %s12, 3
    %p214 = pnand %p212, %p213
    %p215 = pneg %p214
    // Predicated region
    $region41: #{dense_block_forward.1} parent=5 // pred_check
      _
    $region42: #{dense_block_forward.1} parent=5 // pred_check_branch
      %217 = sbr.rel (%p214) target = $region44
    $region43: #{dense_block_forward.1} parent=5 // pred_region
      %s218 = ssub.s32 %s12, 1
      %s219 = smul.u32 2, %s17
      %p220 = scmp.lt.s32.totalorder %s219, 3
      %s221 = scalar_select %p220, %s219, 3
      %s222 = smul.addr %s221, 4
      %s223 = scalar_lea.vmem %s0, %s222
      %p224 = pneg %p38
      %p225 = pneg %p35
      %p226 = pneg %p59
      %p227 = pneg %p56
      %p228 = pneg %p80
      %p229 = pneg %p77
      %p230 = pneg %p101
      %p231 = pneg %p98
      %p232 = pneg %p122
      %p233 = pneg %p119
      %p234 = pneg %p143
      %p235 = pneg %p140
      %p236 = pneg %p169
      %p237 = pneg %p166
      %s238 = smul.u32 2, %s17
      %p239 = scmp.lt.s32.totalorder %s238, 3
      %s240 = scalar_select %p239, %s238, 3
      %s241 = smul.addr %s240, 8
      %s242 = scalar_lea.vmem %s6, %s241
      %s243 = smul.u32 2, %s17
      %p244 = scmp.lt.s32.totalorder %s243, 3
      %s245 = scalar_select %p244, %s243, 3
      %s246 = smul.addr %s245, 4
      %s247 = scalar_lea.vmem %s0, %s246
      %s248 = smul.u32 2, %s17
      %s249 = smul.u32 2, %s17
      %p250 = scmp.lt.s32.totalorder %s249, 3
      %s251 = scalar_select %p250, %s249, 3
      %s252 = smul.addr %s251, 8
      %s253 = scalar_lea.vmem %s6, %s252
      %s254 = smul.u32 2, %s17
      %v255 = vld [vmem:[%s247] sm:$0xff]
      %v256 = vld [vmem:[%s1] sm:$0xf]
      %258 = vset.pattern.permute.xlu0 0
      %259 = vperm.xlu0 %258, %v256
      %v260 = vpop.permute.xlu0 %259
      %v262 = vunpack.c.l.s4 839922192
      %v263 = vunpack.c.0.s8 %v262
      %v264 = vperm.slane %v260, %v263
      %v266 = vmul.f32 %v255, %v264
      %v267 = vld [vmem:[%s2] sm:$0xf]
      %269 = vset.pattern.permute.xlu0 0
      %270 = vperm.xlu0 %269, %v267
      %v271 = vpop.permute.xlu0 %270
      %v273 = vunpack.c.l.s4 839922192
      %v274 = vunpack.c.0.s8 %v273
      %v275 = vperm.slane %v271, %v274
      %v277 = vadd.f32 %v266, %v275
      %v278 = vmax.f32 %v277, 0.0
      %v279 = vld [vmem:[%s3] sm:$0xff]
      %v280 = vld [vmem:[%s3 + $0x8] sm:$0xff]
      %v281 = vld [vmem:[%s3 + $0x10] sm:$0xff]
      %v282 = vld [vmem:[%s3 + $0x18] sm:$0xff]
      %v283 = vld [vmem:[%s4] sm:$0xff]
      %v284 = vld [vmem:[%s4 + $0x8] sm:$0xff]
      %v285 = vld [vmem:[%s4 + $0x10] sm:$0xff]
      %v286 = vld [vmem:[%s4 + $0x18] sm:$0xff]
      %288 = vset.pattern.permute.xlu0 0
      %289 = vperm.xlu0 %288, %v283
      %v290 = vpop.permute.xlu0 %289
      %293 = vset.pattern.permute.xlu0 0
      %294 = vperm.xlu0 %293, %v284
      %v295 = vpop.permute.xlu0 %294
      %298 = vset.pattern.permute.xlu0 0
      %299 = vperm.xlu0 %298, %v285
      %v300 = vpop.permute.xlu0 %299
      %303 = vset.pattern.permute.xlu0 0
      %304 = vperm.xlu0 %303, %v286
      %v305 = vpop.permute.xlu0 %304
      %308 = vst [vmem:[#allocation1] ss:$2 sm:$0xff] %v278
      %v309 = vld.sshfl [vmem:[#allocation1] sm:$0xff pattern:$0x75316420]
      %v310 = vld.sshfl [vmem:[#allocation1 + $0x8] sm:$0xff pattern:$0x75316420]
      %vm311 = vcmask 31744
      %v313 = vsel %vm311, %v279, 0
      %v316 = vsel %vm311, %v280, 0
      %v319 = vsel %vm311, %v281, 0
      %v322 = vsel %vm311, %v282, 0
      %vm324 = vcmask 1043456
      %v325 = vsel %vm324, %v309, 0
      %v327 = vsel %vm324, %v310, 0
      %329 = vmatpush.msra.mxu0 0.0
      %330 = vmatpush.msra.mxu0 0.0
      %331 = vmatpush.msra.mxu0 0.0
      %332 = vmatpush.msra.mxu0 0.0
      %333 = vmatpush.msra.mxu0 0.0
      %334 = vmatpush.msra.mxu0 0.0
      %335 = vmatpush.msra.mxu0 0.0
      %336 = vmatpush.msra.mxu0 0.0
      %337 = vmatpush.msra.mxu0 0.0
      %338 = vmatpush.msra.mxu0 0.0
      %339 = vmatpush.msra.mxu0 0.0
      %340 = vmatpush.msra.mxu0 0.0
      %341 = vmatpush.msra.mxu0 0.0
      %342 = vmatpush.msra.mxu0 0.0
      %343 = vmatpush.msra.mxu0 0.0
      %344 = vmatpush.msra.mxu0 %v325
      %345 = vmatmul.f32.gmra.mxu0 %v313
      %v346 = vpop.f32.mrf.mxu0
      %v347 = vadd.f32 %v290, %v346
      %348 = vmatmul.f32.gmra.mxu0 %v316
      %v349 = vpop.f32.mrf.mxu0
      %v350 = vadd.f32 %v295, %v349
      %351 = vmatmul.f32.gmra.mxu0 %v319
      %v352 = vpop.f32.mrf.mxu0
      %v353 = vadd.f32 %v300, %v352
      %354 = vmatmul.f32.gmra.mxu0 %v322
      %v355 = vpop.f32.mrf.mxu0
      %v356 = vadd.f32 %v305, %v355
      %357 = vdwg.mxu0
      %358 = vmatpush.msra.mxu0 0.0
      %359 = vmatpush.msra.mxu0 0.0
      %360 = vmatpush.msra.mxu0 0.0
      %361 = vmatpush.msra.mxu0 0.0
      %362 = vmatpush.msra.mxu0 0.0
      %363 = vmatpush.msra.mxu0 0.0
      %364 = vmatpush.msra.mxu0 0.0
      %365 = vmatpush.msra.mxu0 0.0
      %366 = vmatpush.msra.mxu0 0.0
      %367 = vmatpush.msra.mxu0 0.0
      %368 = vmatpush.msra.mxu0 0.0
      %369 = vmatpush.msra.mxu0 0.0
      %370 = vmatpush.msra.mxu0 0.0
      %371 = vmatpush.msra.mxu0 0.0
      %372 = vmatpush.msra.mxu0 0.0
      %373 = vmatpush.msra.mxu0 %v327
      %374 = vmatmul.f32.gmra.mxu0 %v313
      %v375 = vpop.f32.mrf.mxu0
      %v376 = vadd.f32 %v290, %v375
      %377 = vmatmul.f32.gmra.mxu0 %v316
      %v378 = vpop.f32.mrf.mxu0
      %v379 = vadd.f32 %v295, %v378
      %380 = vmatmul.f32.gmra.mxu0 %v319
      %v381 = vpop.f32.mrf.mxu0
      %v382 = vadd.f32 %v300, %v381
      %383 = vmatmul.f32.gmra.mxu0 %v322
      %v384 = vpop.f32.mrf.mxu0
      %v385 = vadd.f32 %v305, %v384
      %386 = vdwg.mxu0
      %v387 = vmax.f32 %v347, 0.0
      %v388 = vmax.f32 %v376, 0.0
      %v389 = vmax.f32 %v350, 0.0
      %v390 = vmax.f32 %v379, 0.0
      %v391 = vmax.f32 %v353, 0.0
      %v392 = vmax.f32 %v382, 0.0
      %v393 = vmax.f32 %v356, 0.0
      %v394 = vmax.f32 %v385, 0.0
      %v395 = vlaneseq
      %v396 = vand.u32 %v395, 127
      %v397 = vadd.s32 %v396, 128
      %vm398 = vcmp.lt.s32.totalorder %v396, 0
      %v399 = vsub.s32 0, %v396
      %v400 = vsel %vm398, %v399, %v396
      %v401 = vshrl.u32 %v400, 4
      %v402 = vand.u32 %v400, 15
      %v403 = vsub.s32 0, %v402
      %v404 = vsel %vm398, %v403, %v402
      %vm405 = vcmp.lt.s32.totalorder %v397, 0
      %v406 = vsub.s32 0, %v397
      %v407 = vsel %vm405, %v406, %v397
      %v408 = vshrl.u32 %v407, 4
      %v409 = vand.u32 %v407, 15
      %v410 = vsub.s32 0, %v409
      %v411 = vsel %vm405, %v410, %v409
      %vm412 = vcmp.ne.s32.totalorder %v404, 0
      %vm413 = vcmp.ne.s32.totalorder %v411, 0
      %vm414 = vcmp.lt.s32.totalorder %v404, 0
      %vm415 = vcmp.lt.s32.totalorder %v411, 0
      %vm416 = vmand %vm414, %vm412
      %vm417 = vmand %vm415, %vm413
      %v418 = vadd.s32 %v404, 16
      %v419 = vadd.s32 %v411, 16
      %v420 = vsel %vm416, %v418, %v404
      %v421 = vsel %vm417, %v419, %v411
      %422 = vrot.lane.b32.xlu0 %v387, 17
      %v423 = vpop.permute.xlu0 %422
      %424 = vrot.lane.b32.xlu0 %v389, 17
      %v425 = vpop.permute.xlu0 %424
      %426 = vrot.lane.b32.xlu0 %v391, 17
      %v427 = vpop.permute.xlu0 %426
      %428 = vrot.lane.b32.xlu0 %v393, 17
      %v429 = vpop.permute.xlu0 %428
      %430 = vrot.lane.b32.xlu0 %v388, 17
      %v431 = vpop.permute.xlu0 %430
      %432 = vrot.lane.b32.xlu0 %v390, 17
      %v433 = vpop.permute.xlu0 %432
      %434 = vrot.lane.b32.xlu0 %v392, 17
      %v435 = vpop.permute.xlu0 %434
      %436 = vrot.lane.b32.xlu0 %v394, 17
      %v437 = vpop.permute.xlu0 %436
      %vm438 = vcmp.lt.s32.totalorder %v396, 17
      %v439 = vsel %vm438, %v423, %v431
      %v440 = vsel %vm438, %v425, %v433
      %v441 = vsel %vm438, %v427, %v435
      %v442 = vsel %vm438, %v429, %v437
      %v443 = vsel %vm438, %v431, %v423
      %v444 = vsel %vm438, %v433, %v425
      %v445 = vsel %vm438, %v435, %v427
      %v446 = vsel %vm438, %v437, %v429
      %v447 = vadd.s32 %v396, 4294967279
      %v448 = vadd.s32 %v397, 4294967279
      %vm449 = vcmp.ge.s32.totalorder %v447, 0
      %vm450 = vcmp.ge.s32.totalorder %v448, 0
      %vm451 = vcmp.lt.s32.totalorder %v447, 256
      %vm452 = vcmp.lt.s32.totalorder %v448, 256
      %vm453 = vmand %vm449, %vm451
      %vm454 = vmand %vm450, %vm452
      %v455 = vadd.s32 %v420, 4294967295
      %v456 = vadd.s32 %v421, 4294967295
      %vm457 = vcmp.ge.s32.totalorder %v455, 0
      %vm458 = vcmp.ge.s32.totalorder %v456, 0
      %vm459 = vmand %vm453, %vm457
      %vm460 = vmand %vm454, %vm458
      %vm461 = vcmp.lt.s32.totalorder %v455, 16
      %vm462 = vcmp.lt.s32.totalorder %v456, 16
      %vm463 = vmand %vm459, %vm461
      %vm464 = vmand %vm460, %vm462
      %v465 = vsel %vm463, %v443, 0.0
      %v466 = vsel %vm464, %v439, 0.0
      %v467 = vsel %vm463, %v444, 0.0
      %v468 = vsel %vm464, %v440, 0.0
      %v469 = vsel %vm463, %v445, 0.0
      %v470 = vsel %vm464, %v441, 0.0
      %v471 = vsel %vm463, %v446, 0.0
      %v472 = vsel %vm464, %v442, 0.0
      %473 = vrot.lane.b32.xlu0 %v387, 16
      %v474 = vpop.permute.xlu0 %473
      %475 = vrot.lane.b32.xlu0 %v389, 16
      %v476 = vpop.permute.xlu0 %475
      %477 = vrot.lane.b32.xlu0 %v391, 16
      %v478 = vpop.permute.xlu0 %477
      %479 = vrot.lane.b32.xlu0 %v393, 16
      %v480 = vpop.permute.xlu0 %479
      %481 = vrot.lane.b32.xlu0 %v388, 16
      %v482 = vpop.permute.xlu0 %481
      %483 = vrot.lane.b32.xlu0 %v390, 16
      %v484 = vpop.permute.xlu0 %483
      %485 = vrot.lane.b32.xlu0 %v392, 16
      %v486 = vpop.permute.xlu0 %485
      %487 = vrot.lane.b32.xlu0 %v394, 16
      %v488 = vpop.permute.xlu0 %487
      %vm489 = vcmp.lt.s32.totalorder %v396, 16
      %v490 = vsel %vm489, %v474, %v482
      %v491 = vsel %vm489, %v476, %v484
      %v492 = vsel %vm489, %v478, %v486
      %v493 = vsel %vm489, %v480, %v488
      %v494 = vsel %vm489, %v482, %v474
      %v495 = vsel %vm489, %v484, %v476
      %v496 = vsel %vm489, %v486, %v478
      %v497 = vsel %vm489, %v488, %v480
      %v498 = vadd.s32 %v396, 4294967280
      %v499 = vadd.s32 %v397, 4294967280
      %vm500 = vcmp.ge.s32.totalorder %v498, 0
      %vm501 = vcmp.ge.s32.totalorder %v499, 0
      %vm502 = vcmp.lt.s32.totalorder %v498, 256
      %vm503 = vcmp.lt.s32.totalorder %v499, 256
      %vm504 = vmand %vm500, %vm502
      %vm505 = vmand %vm501, %vm503
      %vm506 = vcmp.ge.s32.totalorder %v420, 0
      %vm507 = vcmp.ge.s32.totalorder %v421, 0
      %vm508 = vmand %vm504, %vm506
      %vm509 = vmand %vm505, %vm507
      %vm510 = vcmp.lt.s32.totalorder %v420, 16
      %vm511 = vcmp.lt.s32.totalorder %v421, 16
      %vm512 = vmand %vm508, %vm510
      %vm513 = vmand %vm509, %vm511
      %v514 = vsel %vm512, %v494, 0.0
      %v515 = vsel %vm513, %v490, 0.0
      %v516 = vsel %vm512, %v495, 0.0
      %v517 = vsel %vm513, %v491, 0.0
      %v518 = vsel %vm512, %v496, 0.0
      %v519 = vsel %vm513, %v492, 0.0
      %v520 = vsel %vm512, %v497, 0.0
      %v521 = vsel %vm513, %v493, 0.0
      %522 = vrot.lane.b32.xlu0 %v387, 15
      %v523 = vpop.permute.xlu0 %522
      %524 = vrot.lane.b32.xlu0 %v389, 15
      %v525 = vpop.permute.xlu0 %524
      %526 = vrot.lane.b32.xlu0 %v391, 15
      %v527 = vpop.permute.xlu0 %526
      %528 = vrot.lane.b32.xlu0 %v393, 15
      %v529 = vpop.permute.xlu0 %528
      %530 = vrot.lane.b32.xlu0 %v388, 15
      %v531 = vpop.permute.xlu0 %530
      %532 = vrot.lane.b32.xlu0 %v390, 15
      %v533 = vpop.permute.xlu0 %532
      %534 = vrot.lane.b32.xlu0 %v392, 15
      %v535 = vpop.permute.xlu0 %534
      %536 = vrot.lane.b32.xlu0 %v394, 15
      %v537 = vpop.permute.xlu0 %536
      %vm538 = vcmp.lt.s32.totalorder %v396, 15
      %v539 = vsel %vm538, %v523, %v531
      %v540 = vsel %vm538, %v525, %v533
      %v541 = vsel %vm538, %v527, %v535
      %v542 = vsel %vm538, %v529, %v537
      %v543 = vsel %vm538, %v531, %v523
      %v544 = vsel %vm538, %v533, %v525
      %v545 = vsel %vm538, %v535, %v527
      %v546 = vsel %vm538, %v537, %v529
      %v547 = vadd.s32 %v396, 4294967281
      %v548 = vadd.s32 %v397, 4294967281
      %vm549 = vcmp.ge.s32.totalorder %v547, 0
      %vm550 = vcmp.ge.s32.totalorder %v548, 0
      %vm551 = vcmp.lt.s32.totalorder %v547, 256
      %vm552 = vcmp.lt.s32.totalorder %v548, 256
      %vm553 = vmand %vm549, %vm551
      %vm554 = vmand %vm550, %vm552
      %v555 = vadd.s32 %v420, 1
      %v556 = vadd.s32 %v421, 1
      %vm557 = vcmp.ge.s32.totalorder %v555, 0
      %vm558 = vcmp.ge.s32.totalorder %v556, 0
      %vm559 = vmand %vm553, %vm557
      %vm560 = vmand %vm554, %vm558
      %vm561 = vcmp.lt.s32.totalorder %v555, 16
      %vm562 = vcmp.lt.s32.totalorder %v556, 16
      %vm563 = vmand %vm559, %vm561
      %vm564 = vmand %vm560, %vm562
      %v565 = vsel %vm563, %v543, 0.0
      %v566 = vsel %vm564, %v539, 0.0
      %v567 = vsel %vm563, %v544, 0.0
      %v568 = vsel %vm564, %v540, 0.0
      %v569 = vsel %vm563, %v545, 0.0
      %v570 = vsel %vm564, %v541, 0.0
      %v571 = vsel %vm563, %v546, 0.0
      %v572 = vsel %vm564, %v542, 0.0
      %573 = vrot.lane.b32.xlu0 %v387, 1
      %v574 = vpop.permute.xlu0 %573
      %575 = vrot.lane.b32.xlu0 %v389, 1
      %v576 = vpop.permute.xlu0 %575
      %577 = vrot.lane.b32.xlu0 %v391, 1
      %v578 = vpop.permute.xlu0 %577
      %579 = vrot.lane.b32.xlu0 %v393, 1
      %v580 = vpop.permute.xlu0 %579
      %581 = vrot.lane.b32.xlu0 %v388, 1
      %v582 = vpop.permute.xlu0 %581
      %583 = vrot.lane.b32.xlu0 %v390, 1
      %v584 = vpop.permute.xlu0 %583
      %585 = vrot.lane.b32.xlu0 %v392, 1
      %v586 = vpop.permute.xlu0 %585
      %587 = vrot.lane.b32.xlu0 %v394, 1
      %v588 = vpop.permute.xlu0 %587
      %vm589 = vcmp.lt.s32.totalorder %v396, 1
      %v590 = vsel %vm589, %v574, %v582
      %v591 = vsel %vm589, %v576, %v584
      %v592 = vsel %vm589, %v578, %v586
      %v593 = vsel %vm589, %v580, %v588
      %v594 = vsel %vm589, %v582, %v574
      %v595 = vsel %vm589, %v584, %v576
      %v596 = vsel %vm589, %v586, %v578
      %v597 = vsel %vm589, %v588, %v580
      %v598 = vadd.s32 %v396, 4294967295
      %v599 = vadd.s32 %v397, 4294967295
      %vm600 = vcmp.ge.s32.totalorder %v598, 0
      %vm601 = vcmp.ge.s32.totalorder %v599, 0
      %vm602 = vcmp.lt.s32.totalorder %v598, 256
      %vm603 = vcmp.lt.s32.totalorder %v599, 256
      %vm604 = vmand %vm600, %vm602
      %vm605 = vmand %vm601, %vm603
      %vm606 = vmand %vm604, %vm457
      %vm607 = vmand %vm605, %vm458
      %vm608 = vmand %vm606, %vm461
      %vm609 = vmand %vm607, %vm462
      %v610 = vsel %vm608, %v594, 0.0
      %v611 = vsel %vm609, %v590, 0.0
      %v612 = vsel %vm608, %v595, 0.0
      %v613 = vsel %vm609, %v591, 0.0
      %v614 = vsel %vm608, %v596, 0.0
      %v615 = vsel %vm609, %v592, 0.0
      %v616 = vsel %vm608, %v597, 0.0
      %v617 = vsel %vm609, %v593, 0.0
      %vm618 = vcmp.ge.s32.totalorder %v396, 0
      %vm619 = vcmp.ge.s32.totalorder %v397, 0
      %vm620 = vcmp.lt.s32.totalorder %v396, 256
      %vm621 = vcmp.lt.s32.totalorder %v397, 256
      %vm622 = vmand %vm618, %vm620
      %vm623 = vmand %vm619, %vm621
      %vm624 = vmand %vm622, %vm506
      %vm625 = vmand %vm623, %vm507
      %vm626 = vmand %vm624, %vm510
      %vm627 = vmand %vm625, %vm511
      %v628 = vsel %vm626, %v387, 0.0
      %v629 = vsel %vm627, %v388, 0.0
      %v630 = vsel %vm626, %v389, 0.0
      %v631 = vsel %vm627, %v390, 0.0
      %v632 = vsel %vm626, %v391, 0.0
      %v633 = vsel %vm627, %v392, 0.0
      %v634 = vsel %vm626, %v393, 0.0
      %v635 = vsel %vm627, %v394, 0.0
      %636 = vrot.lane.b32.xlu0 %v387, 127
      %v637 = vpop.permute.xlu0 %636
      %638 = vrot.lane.b32.xlu0 %v389, 127
      %v639 = vpop.permute.xlu0 %638
      %640 = vrot.lane.b32.xlu0 %v391, 127
      %v641 = vpop.permute.xlu0 %640
      %642 = vrot.lane.b32.xlu0 %v393, 127
      %v643 = vpop.permute.xlu0 %642
      %644 = vrot.lane.b32.xlu0 %v388, 127
      %v645 = vpop.permute.xlu0 %644
      %646 = vrot.lane.b32.xlu0 %v390, 127
      %v647 = vpop.permute.xlu0 %646
      %648 = vrot.lane.b32.xlu0 %v392, 127
      %v649 = vpop.permute.xlu0 %648
      %650 = vrot.lane.b32.xlu0 %v394, 127
      %v651 = vpop.permute.xlu0 %650
      %vm652 = vcmp.lt.s32.totalorder %v396, 127
      %v653 = vsel %vm652, %v637, %v645
      %v654 = vsel %vm652, %v639, %v647
      %v655 = vsel %vm652, %v641, %v649
      %v656 = vsel %vm652, %v643, %v651
      %v657 = vsel %vm652, %v645, %v637
      %v658 = vsel %vm652, %v647, %v639
      %v659 = vsel %vm652, %v649, %v641
      %v660 = vsel %vm652, %v651, %v643
      %v661 = vadd.s32 %v396, 1
      %v662 = vadd.s32 %v397, 1
      %vm663 = vcmp.ge.s32.totalorder %v661, 0
      %vm664 = vcmp.ge.s32.totalorder %v662, 0
      %vm665 = vcmp.lt.s32.totalorder %v661, 256
      %vm666 = vcmp.lt.s32.totalorder %v662, 256
      %vm667 = vmand %vm663, %vm665
      %vm668 = vmand %vm664, %vm666
      %vm669 = vmand %vm667, %vm557
      %vm670 = vmand %vm668, %vm558
      %vm671 = vmand %vm669, %vm561
      %vm672 = vmand %vm670, %vm562
      %v673 = vsel %vm671, %v653, 0.0
      %v674 = vsel %vm672, %v657, 0.0
      %v675 = vsel %vm671, %v654, 0.0
      %v676 = vsel %vm672, %v658, 0.0
      %v677 = vsel %vm671, %v655, 0.0
      %v678 = vsel %vm672, %v659, 0.0
      %v679 = vsel %vm671, %v656, 0.0
      %v680 = vsel %vm672, %v660, 0.0
      %681 = vrot.lane.b32.xlu0 %v387, 113
      %v682 = vpop.permute.xlu0 %681
      %683 = vrot.lane.b32.xlu0 %v389, 113
      %v684 = vpop.permute.xlu0 %683
      %685 = vrot.lane.b32.xlu0 %v391, 113
      %v686 = vpop.permute.xlu0 %685
      %687 = vrot.lane.b32.xlu0 %v393, 113
      %v688 = vpop.permute.xlu0 %687
      %689 = vrot.lane.b32.xlu0 %v388, 113
      %v690 = vpop.permute.xlu0 %689
      %691 = vrot.lane.b32.xlu0 %v390, 113
      %v692 = vpop.permute.xlu0 %691
      %693 = vrot.lane.b32.xlu0 %v392, 113
      %v694 = vpop.permute.xlu0 %693
      %695 = vrot.lane.b32.xlu0 %v394, 113
      %v696 = vpop.permute.xlu0 %695
      %vm697 = vcmp.lt.s32.totalorder %v396, 113
      %v698 = vsel %vm697, %v682, %v690
      %v699 = vsel %vm697, %v684, %v692
      %v700 = vsel %vm697, %v686, %v694
      %v701 = vsel %vm697, %v688, %v696
      %v702 = vsel %vm697, %v690, %v682
      %v703 = vsel %vm697, %v692, %v684
      %v704 = vsel %vm697, %v694, %v686
      %v705 = vsel %vm697, %v696, %v688
      %v706 = vadd.s32 %v396, 15
      %v707 = vadd.s32 %v397, 15
      %vm708 = vcmp.ge.s32.totalorder %v706, 0
      %vm709 = vcmp.ge.s32.totalorder %v707, 0
      %vm710 = vcmp.lt.s32.totalorder %v706, 256
      %vm711 = vcmp.lt.s32.totalorder %v707, 256
      %vm712 = vmand %vm708, %vm710
      %vm713 = vmand %vm709, %vm711
      %vm714 = vmand %vm712, %vm457
      %vm715 = vmand %vm713, %vm458
      %vm716 = vmand %vm714, %vm461
      %vm717 = vmand %vm715, %vm462
      %v718 = vsel %vm716, %v698, 0.0
      %v719 = vsel %vm717, %v702, 0.0
      %v720 = vsel %vm716, %v699, 0.0
      %v721 = vsel %vm717, %v703, 0.0
      %v722 = vsel %vm716, %v700, 0.0
      %v723 = vsel %vm717, %v704, 0.0
      %v724 = vsel %vm716, %v701, 0.0
      %v725 = vsel %vm717, %v705, 0.0
      %726 = vrot.lane.b32.xlu0 %v387, 112
      %v727 = vpop.permute.xlu0 %726
      %728 = vrot.lane.b32.xlu0 %v389, 112
      %v729 = vpop.permute.xlu0 %728
      %730 = vrot.lane.b32.xlu0 %v391, 112
      %v731 = vpop.permute.xlu0 %730
      %732 = vrot.lane.b32.xlu0 %v393, 112
      %v733 = vpop.permute.xlu0 %732
      %734 = vrot.lane.b32.xlu0 %v388, 112
      %v735 = vpop.permute.xlu0 %734
      %736 = vrot.lane.b32.xlu0 %v390, 112
      %v737 = vpop.permute.xlu0 %736
      %738 = vrot.lane.b32.xlu0 %v392, 112
      %v739 = vpop.permute.xlu0 %738
      %740 = vrot.lane.b32.xlu0 %v394, 112
      %v741 = vpop.permute.xlu0 %740
      %vm742 = vcmp.lt.s32.totalorder %v396, 112
      %v743 = vsel %vm742, %v727, %v735
      %v744 = vsel %vm742, %v729, %v737
      %v745 = vsel %vm742, %v731, %v739
      %v746 = vsel %vm742, %v733, %v741
      %v747 = vsel %vm742, %v735, %v727
      %v748 = vsel %vm742, %v737, %v729
      %v749 = vsel %vm742, %v739, %v731
      %v750 = vsel %vm742, %v741, %v733
      %v751 = vadd.s32 %v396, 16
      %v752 = vadd.s32 %v397, 16
      %vm753 = vcmp.ge.s32.totalorder %v751, 0
      %vm754 = vcmp.ge.s32.totalorder %v752, 0
      %vm755 = vcmp.lt.s32.totalorder %v751, 256
      %vm756 = vcmp.lt.s32.totalorder %v752, 256
      %vm757 = vmand %vm753, %vm755
      %vm758 = vmand %vm754, %vm756
      %vm759 = vmand %vm757, %vm506
      %vm760 = vmand %vm758, %vm507
      %vm761 = vmand %vm759, %vm510
      %vm762 = vmand %vm760, %vm511
      %v763 = vsel %vm761, %v743, 0.0
      %v764 = vsel %vm762, %v747, 0.0
      %v765 = vsel %vm761, %v744, 0.0
      %v766 = vsel %vm762, %v748, 0.0
      %v767 = vsel %vm761, %v745, 0.0
      %v768 = vsel %vm762, %v749, 0.0
      %v769 = vsel %vm761, %v746, 0.0
      %v770 = vsel %vm762, %v750, 0.0
      %771 = vrot.lane.b32.xlu0 %v387, 111
      %v772 = vpop.permute.xlu0 %771
      %773 = vrot.lane.b32.xlu0 %v389, 111
      %v774 = vpop.permute.xlu0 %773
      %775 = vrot.lane.b32.xlu0 %v391, 111
      %v776 = vpop.permute.xlu0 %775
      %777 = vrot.lane.b32.xlu0 %v393, 111
      %v778 = vpop.permute.xlu0 %777
      %779 = vrot.lane.b32.xlu0 %v388, 111
      %v780 = vpop.permute.xlu0 %779
      %781 = vrot.lane.b32.xlu0 %v390, 111
      %v782 = vpop.permute.xlu0 %781
      %783 = vrot.lane.b32.xlu0 %v392, 111
      %v784 = vpop.permute.xlu0 %783
      %785 = vrot.lane.b32.xlu0 %v394, 111
      %v786 = vpop.permute.xlu0 %785
      %vm787 = vcmp.lt.s32.totalorder %v396, 111
      %v788 = vsel %vm787, %v772, %v780
      %v789 = vsel %vm787, %v774, %v782
      %v790 = vsel %vm787, %v776, %v784
      %v791 = vsel %vm787, %v778, %v786
      %v792 = vsel %vm787, %v780, %v772
      %v793 = vsel %vm787, %v782, %v774
      %v794 = vsel %vm787, %v784, %v776
      %v795 = vsel %vm787, %v786, %v778
      %v796 = vadd.s32 %v396, 17
      %v797 = vadd.s32 %v397, 17
      %vm798 = vcmp.ge.s32.totalorder %v796, 0
      %vm799 = vcmp.ge.s32.totalorder %v797, 0
      %vm800 = vcmp.lt.s32.totalorder %v796, 256
      %vm801 = vcmp.lt.s32.totalorder %v797, 256
      %vm802 = vmand %vm798, %vm800
      %vm803 = vmand %vm799, %vm801
      %vm804 = vmand %vm802, %vm557
      %vm805 = vmand %vm803, %vm558
      %vm806 = vmand %vm804, %vm561
      %vm807 = vmand %vm805, %vm562
      %v808 = vsel %vm806, %v788, 0.0
      %v809 = vsel %vm807, %v792, 0.0
      %v810 = vsel %vm806, %v789, 0.0
      %v811 = vsel %vm807, %v793, 0.0
      %v812 = vsel %vm806, %v790, 0.0
      %v813 = vsel %vm807, %v794, 0.0
      %v814 = vsel %vm806, %v791, 0.0
      %v815 = vsel %vm807, %v795, 0.0
      %v816 = vld [vmem:[%s5] sm:$0xff]
      %v817 = vld [vmem:[%s5 + $0x8] sm:$0xff]
      %v818 = vld [vmem:[%s5 + $0x10] sm:$0xff]
      %vm819 = vcmask 261120
      %v821 = vsel %vm819, %v818, 0
      %823 = vmatpush.msra.mxu0 %v616
      %824 = vmatpush.msra.mxu0 %v614
      %825 = vmatpush.msra.mxu0 %v612
      %826 = vmatpush.msra.mxu0 %v610
      %827 = vmatpush.msra.mxu0 %v571
      %828 = vmatpush.msra.mxu0 %v569
      %829 = vmatpush.msra.mxu0 %v567
      %830 = vmatpush.msra.mxu0 %v565
      %831 = vmatpush.msra.mxu0 %v520
      %832 = vmatpush.msra.mxu0 %v518
      %833 = vmatpush.msra.mxu0 %v516
      %834 = vmatpush.msra.mxu0 %v514
      %835 = vmatpush.msra.mxu0 %v471
      %836 = vmatpush.msra.mxu0 %v469
      %837 = vmatpush.msra.mxu0 %v467
      %838 = vmatpush.msra.mxu0 %v465
      %839 = vmatmul.f32.gmra.mxu0 %v816
      %v840 = vpop.f32.mrf.mxu0
      %v841 = vadd.f32 0.0, %v840
      %842 = vdwg.mxu0
      %843 = vmatpush.msra.mxu0 %v769
      %844 = vmatpush.msra.mxu0 %v767
      %845 = vmatpush.msra.mxu0 %v765
      %846 = vmatpush.msra.mxu0 %v763
      %847 = vmatpush.msra.mxu0 %v724
      %848 = vmatpush.msra.mxu0 %v722
      %849 = vmatpush.msra.mxu0 %v720
      %850 = vmatpush.msra.mxu0 %v718
      %851 = vmatpush.msra.mxu0 %v679
      %852 = vmatpush.msra.mxu0 %v677
      %853 = vmatpush.msra.mxu0 %v675
      %854 = vmatpush.msra.mxu0 %v673
      %855 = vmatpush.msra.mxu0 %v634
      %856 = vmatpush.msra.mxu0 %v632
      %857 = vmatpush.msra.mxu0 %v630
      %858 = vmatpush.msra.mxu0 %v628
      %859 = vmatmul.f32.gmra.mxu0 %v817
      %v860 = vpop.f32.mrf.mxu0
      %v861 = vadd.f32 %v841, %v860
      %862 = vdwg.mxu0
      %863 = vmatpush.msra.mxu0 0.0
      %864 = vmatpush.msra.mxu0 0.0
      %865 = vmatpush.msra.mxu0 0.0
      %866 = vmatpush.msra.mxu0 0.0
      %867 = vmatpush.msra.mxu0 0.0
      %868 = vmatpush.msra.mxu0 0.0
      %869 = vmatpush.msra.mxu0 0.0
      %870 = vmatpush.msra.mxu0 0.0
      %871 = vmatpush.msra.mxu0 0.0
      %872 = vmatpush.msra.mxu0 0.0
      %873 = vmatpush.msra.mxu0 0.0
      %874 = vmatpush.msra.mxu0 0.0
      %875 = vmatpush.msra.mxu0 %v814
      %876 = vmatpush.msra.mxu0 %v812
      %877 = vmatpush.msra.mxu0 %v810
      %878 = vmatpush.msra.mxu0 %v808
      %879 = vmatmul.f32.gmra.mxu0 %v821
      %v880 = vpop.f32.mrf.mxu0
      %v881 = vadd.f32 %v861, %v880
      %882 = vdwg.mxu0
      %883 = vmatpush.msra.mxu0 %v617
      %884 = vmatpush.msra.mxu0 %v615
      %885 = vmatpush.msra.mxu0 %v613
      %886 = vmatpush.msra.mxu0 %v611
      %887 = vmatpush.msra.mxu0 %v572
      %888 = vmatpush.msra.mxu0 %v570
      %889 = vmatpush.msra.mxu0 %v568
      %890 = vmatpush.msra.mxu0 %v566
      %891 = vmatpush.msra.mxu0 %v521
      %892 = vmatpush.msra.mxu0 %v519
      %893 = vmatpush.msra.mxu0 %v517
      %894 = vmatpush.msra.mxu0 %v515
      %895 = vmatpush.msra.mxu0 %v472
      %896 = vmatpush.msra.mxu0 %v470
      %897 = vmatpush.msra.mxu0 %v468
      %898 = vmatpush.msra.mxu0 %v466
      %899 = vmatmul.f32.gmra.mxu0 %v816
      %v900 = vpop.f32.mrf.mxu0
      %v901 = vadd.f32 0.0, %v900
      %902 = vdwg.mxu0
      %903 = vmatpush.msra.mxu0 %v770
      %904 = vmatpush.msra.mxu0 %v768
      %905 = vmatpush.msra.mxu0 %v766
      %906 = vmatpush.msra.mxu0 %v764
      %907 = vmatpush.msra.mxu0 %v725
      %908 = vmatpush.msra.mxu0 %v723
      %909 = vmatpush.msra.mxu0 %v721
      %910 = vmatpush.msra.mxu0 %v719
      %911 = vmatpush.msra.mxu0 %v680
      %912 = vmatpush.msra.mxu0 %v678
      %913 = vmatpush.msra.mxu0 %v676
      %914 = vmatpush.msra.mxu0 %v674
      %915 = vmatpush.msra.mxu0 %v635
      %916 = vmatpush.msra.mxu0 %v633
      %917 = vmatpush.msra.mxu0 %v631
      %918 = vmatpush.msra.mxu0 %v629
      %919 = vmatmul.f32.gmra.mxu0 %v817
      %v920 = vpop.f32.mrf.mxu0
      %v921 = vadd.f32 %v901, %v920
      %922 = vdwg.mxu0
      %923 = vmatpush.msra.mxu0 0.0
      %924 = vmatpush.msra.mxu0 0.0
      %925 = vmatpush.msra.mxu0 0.0
      %926 = vmatpush.msra.mxu0 0.0
      %927 = vmatpush.msra.mxu0 0.0
      %928 = vmatpush.msra.mxu0 0.0
      %929 = vmatpush.msra.mxu0 0.0
      %930 = vmatpush.msra.mxu0 0.0
      %931 = vmatpush.msra.mxu0 0.0
      %932 = vmatpush.msra.mxu0 0.0
      %933 = vmatpush.msra.mxu0 0.0
      %934 = vmatpush.msra.mxu0 0.0
      %935 = vmatpush.msra.mxu0 %v815
      %936 = vmatpush.msra.mxu0 %v813
      %937 = vmatpush.msra.mxu0 %v811
      %938 = vmatpush.msra.mxu0 %v809
      %939 = vmatmul.f32.gmra.mxu0 %v821
      %v940 = vpop.f32.mrf.mxu0
      %v941 = vadd.f32 %v921, %v940
      %942 = vdwg.mxu0
      %943 = vst [vmem:[%s253] sm:$0xff] %v881
      %944 = vst [vmem:[%s253 + $0x8] sm:$0xff] %v941
      %s945 = smul.u32 2, %s17
      %p946 = scmp.lt.s32.totalorder %s945, 3
      %s947 = scalar_select %p946, %s945, 3
      %s948 = smul.addr %s947, 8
      %s949 = scalar_lea.vmem %s6, %s948
      // Predicated region
      $region45: #{dense_block_forward.1} parent=43 // pred_check
        %p950 = pneg %p166
      $region46: #{dense_block_forward.1} parent=43 // pred_check_branch
        %952 = sbr.rel (%p950) target = $region48
      $region47: #{dense_block_forward.1} parent=43 // pred_region
        %s953 = smul.u32 2, %s17
      $region48: #{dense_block_forward.1} parent=43 // pred_fallthru
        _
    $region44: #{dense_block_forward.1} parent=5 // pred_fallthru
      _
    %p954 = scmp.le.s32.totalorder 2, %s12
    // Predicated region
    $region49: #{dense_block_forward.1} parent=5 // pred_check
      %p955 = pneg %p954
    $region50: #{dense_block_forward.1} parent=5 // pred_check_branch
      %957 = sbr.rel (%p955) target = $region52
    $region51: #{dense_block_forward.1} parent=5 // pred_region
      %s958 = ssub.s32 %s12, 2
      // Predicated region
      $region53: #{dense_block_forward.1} parent=51 // pred_check
        %p959 = pneg %p172
      $region54: #{dense_block_forward.1} parent=51 // pred_check_branch
        %961 = sbr.rel (%p959) target = $region56
      $region55: #{dense_block_forward.1} parent=51 // pred_region
        %s962 = smul.u32 2, %s18
        %p963 = scmp.lt.s32.totalorder %s962, 3
        %s964 = scalar_select %p963, %s962, 3
        %s965 = smul.addr %s964, 8
        %s966 = scalar_lea.vmem %s6, %s965
      $region56: #{dense_block_forward.1} parent=51 // pred_fallthru
        _
    $region52: #{dense_block_forward.1} parent=5 // pred_fallthru
      _
  $region6: #{dense_block_forward.1} parent=0 // loop_footer
    %s16 = sadd.s32 1, %s12
  $region7: #{dense_block_forward.1} parent=0 // loop_footer_branch
    %11 = sbr.rel target = $region3
  $region8: #{dense_block_forward.1} parent=0 // loop_exit
    _

</llo_original>
